<compile_context>
chip_gen: v6e
topology: v6e:2x2x1
jax: 0.10.0
libtpu: 0.0.40
codegen_flags: <defaults>
</compile_context>

<pallas_src>
import jax
import jax.numpy as jnp
from jax.experimental import pallas as pl
from jax.experimental.pallas import tpu as pltpu

NEG = -1e30  # "minus infinity" for pool masking / softmax padding


def _round_up(x, m):
    return ((x + m - 1) // m) * m


def _make_kernel(TB, S, F, filter_sizes, output_dim):
    fs_max = max(filter_sizes)
    BS = TB * S

    def kernel(x_ref, w_ref, cb_ref, wfc_ref, bfc_ref, probs_ref, cat_ref):
        # Single matmul for all filters / taps / batch rows: (BS, E) @ (E, NPAD) -> f32.
        P = jnp.dot(x_ref[...], w_ref[...], preferred_element_type=jnp.float32)

        # Tap-shifted copies via sublane rotation: shifted[j][r] == P[(r + j) mod BS].
        # Wrapped rows only reach positions that are masked before the max-pool.
        shifted = [P]
        for j in range(1, fs_max):
            shifted.append(pltpu.roll(P, BS - j, axis=0))

        # sequence-position index, hoisted out of the filter loop
        t_pos = jax.lax.broadcasted_iota(jnp.int32, (TB, S, F), 1)

        # zero-init so the padded lanes of cat are deterministic (and 0 * W_fc_pad = 0)
        cat_ref[...] = jnp.zeros(cat_ref.shape, cat_ref.dtype)

        col = 0
        for idx, fs in enumerate(filter_sizes):
            acc = shifted[0][:, col * F:(col + 1) * F]          # tap j = 0
            for j in range(1, fs):
                acc = acc + shifted[j][:, (col + j) * F:(col + j + 1) * F]
            col += fs
            L = S - fs + 1                                      # valid conv length
            acc3 = acc.reshape(TB, S, F)
            acc3 = jnp.where(t_pos < L, acc3, NEG)              # mask invalid positions
            pooled = jnp.max(acc3, axis=1)                      # global max-pool (TB, F)
            pooled = jnp.maximum(pooled + cb_ref[:, idx * F:(idx + 1) * F], 0.0)
            cat_ref[:, idx * F:(idx + 1) * F] = pooled          # direct static-slice store

        # dropout is identity at inference time
        cat = cat_ref[...]                                      # (TB, CPAD), lane-dense
        logits = jnp.dot(cat.astype(wfc_ref.dtype), wfc_ref[...],
                         preferred_element_type=jnp.float32) + bfc_ref[...]
        if output_dim == 1:
            probs = pl.reciprocal(1.0 + jnp.exp(-logits), approx=True)     # sigmoid
        else:
            m = jnp.max(logits, axis=1, keepdims=True)                     # softmax
            e = jnp.exp(logits - m)
            probs = e * pl.reciprocal(jnp.sum(e, axis=1, keepdims=True), approx=True)
        probs_ref[...] = probs

    return kernel


def cnn_depression_forward(x, conv_ws, conv_bs, fc_w, fc_b, *,
                           filter_sizes, output_dim,
                           compute_dtype=jnp.float32):
    """x: (B, S, E).  conv_ws[i]: (n_filters, fs_i, E)  (PyTorch (F,1,fs,E) squeezed).
    fc_w: (output_dim, C), fc_b: (output_dim,).  Returns (probs (B,out), cat (B,C))."""
    B, S, E = x.shape
    F = conv_ws[0].shape[0]
    nfs = len(filter_sizes)
    C = nfs * F
    T = sum(filter_sizes)

    NPAD = _round_up(T * F, 128)        # conv-matmul output lanes
    CPAD = _round_up(C, 128)            # cat lanes
    OPAD = _round_up(output_dim, 128)   # fc output lanes

    # ---- weight / bias repacking (layout plumbing, done once in the wrapper) ----
    w_all = jnp.zeros((E, NPAD), jnp.float32)
    col = 0
    for w, fs in zip(conv_ws, filter_sizes):
        for j in range(fs):
            w_all = w_all.at[:, col * F:(col + 1) * F].set(w[:, j, :].T)
            col += 1
    cb = jnp.zeros((1, CPAD), jnp.float32)
    for idx, b in enumerate(conv_bs):
        cb = cb.at[0, idx * F:(idx + 1) * F].set(b)
    wfc = jnp.zeros((CPAD, OPAD), jnp.float32).at[:C, :output_dim].set(fc_w.T)
    pad_bias = 0.0 if output_dim == 1 else NEG      # padded logits vanish in softmax
    bfc = jnp.full((1, OPAD), pad_bias, jnp.float32).at[0, :output_dim].set(fc_b)

    # bf16 operands recommended on v6e/v7x (accumulation stays f32 inside the kernel)
    x2 = x.reshape(B * S, E).astype(compute_dtype)
    w_all = w_all.astype(compute_dtype)
    wfc = wfc.astype(compute_dtype)

    # batch tiling: parallel grid -> sharded across the two TensorCores on v7x
    TB = B if (B <= 8 or B % 8 != 0) else 8
    grid = (pl.cdiv(B, TB),)

    kernel = _make_kernel(TB, S, F, tuple(filter_sizes), output_dim)

    probs_pad, cat_pad = pl.pallas_call(
        kernel,
        grid=grid,
        in_specs=[
            pl.BlockSpec((TB * S, E), lambda i: (i, 0)),     # x (flattened rows)
            pl.BlockSpec((E, NPAD), lambda i: (0, 0)),       # packed conv weights
            pl.BlockSpec((1, CPAD), lambda i: (0, 0)),       # packed conv biases
            pl.BlockSpec((CPAD, OPAD), lambda i: (0, 0)),    # padded FC weight
            pl.BlockSpec((1, OPAD), lambda i: (0, 0)),       # padded FC bias
        ],
        out_specs=(
            pl.BlockSpec((TB, OPAD), lambda i: (i, 0)),      # lane-dense probs
            pl.BlockSpec((TB, CPAD), lambda i: (i, 0)),      # lane-dense cat
        ),
        out_shape=(
            jax.ShapeDtypeStruct((B, OPAD), jnp.float32),
            jax.ShapeDtypeStruct((B, CPAD), jnp.float32),
        ),
        compiler_params=pltpu.CompilerParams(
            dimension_semantics=("parallel",),
            vmem_limit_bytes=32 * 1024 * 1024,
        ),
    )(x2, w_all, cb, wfc, bfc)

    return probs_pad[:, :output_dim], cat_pad[:, :C]


def _reference(x, conv_ws, conv_bs, fc_w, fc_b, filter_sizes, output_dim):
    """Plain-JAX reference matching the PyTorch forward (pool='max', eval mode)."""
    B, S, E = x.shape
    pooled = []
    for w, b, fs in zip(conv_ws, conv_bs, filter_sizes):
        L = S - fs + 1
        windows = jnp.stack([x[:, t:t + fs, :] for t in range(L)], axis=1)  # (B,L,fs,E)
        conv = jnp.einsum('blje,fje->blf', windows, w) + b
        conv = jnp.maximum(conv, 0.0)
        pooled.append(jnp.max(conv, axis=1))
    cat = jnp.concatenate(pooled, axis=1)
    logits = cat @ fc_w.T + fc_b
    probs = jax.nn.sigmoid(logits) if output_dim == 1 else jax.nn.softmax(logits, axis=1)
    return probs, cat


if __name__ == "__main__":
    key = jax.random.PRNGKey(0)
    B, S, E = 2, 8, 32
    n_filters = 8
    filter_sizes = (2, 3, 4)

    keys = jax.random.split(key, len(filter_sizes) + 3)
    conv_ws, conv_bs = [], []
    for i, fs in enumerate(filter_sizes):
        # xavier_normal_ for Conv2d(1, n_filters, (fs, E)); bias.fill_(0.1)
        fan_in = 1 * fs * E
        fan_out = n_filters * fs * E
        std = (2.0 / (fan_in + fan_out)) ** 0.5
        conv_ws.append(std * jax.random.normal(keys[i], (n_filters, fs, E), jnp.float32))
        conv_bs.append(jnp.full((n_filters,), 0.1, jnp.float32))

    C = len(filter_sizes) * n_filters
    x = jax.random.normal(keys[-1], (B, S, E), jnp.float32)

    # exercise both the softmax (output_dim > 1) and sigmoid (output_dim == 1) heads
    for output_dim, fkey in ((2, keys[-3]), (1, keys[-2])):
        std_fc = (2.0 / (C + output_dim)) ** 0.5           # xavier_normal_ for Linear
        fc_w = std_fc * jax.random.normal(fkey, (output_dim, C), jnp.float32)
        fc_b = jnp.full((output_dim,), 0.1, jnp.float32)   # bias.fill_(0.1)

        probs, cat = cnn_depression_forward(x, conv_ws, conv_bs, fc_w, fc_b,
                                            filter_sizes=filter_sizes,
                                            output_dim=output_dim)
        jax.block_until_ready((probs, cat))

        ref_probs, ref_cat = _reference(x, conv_ws, conv_bs, fc_w, fc_b,
                                        filter_sizes, output_dim)
        assert probs.shape == (B, output_dim) and cat.shape == (B, C)
        assert jnp.allclose(cat, ref_cat, atol=1e-5, rtol=1e-5)
        # probs tolerance covers pl.reciprocal(approx=True) in the sigmoid/softmax denom
        assert jnp.allclose(probs, ref_probs, atol=1e-3, rtol=1e-3)

    # TODO(synk): dropout implemented as identity (eval-mode semantics); training-mode
    # stochastic dropout would need pltpu.prng_seed / stateful_bernoulli.
    # TODO(synk): only pool='max' is implemented; 'k-max'/'mix'/'avg' are not translated.
    print("KERNEL_OK")
</pallas_src>

<mosaic_0001>
module attributes {stable_mosaic.version = 11 : i64} {
  func.func @kernel(%arg0: i32, %arg1: memref<16x32xf32, #tpu.memory_space<vmem>>, %arg2: memref<32x128xf32, #tpu.memory_space<vmem>>, %arg3: memref<1x128xf32, #tpu.memory_space<vmem>>, %arg4: memref<128x128xf32, #tpu.memory_space<vmem>>, %arg5: memref<1x128xf32, #tpu.memory_space<vmem>>, %arg6: memref<2x128xf32, #tpu.memory_space<vmem>>, %arg7: memref<2x128xf32, #tpu.memory_space<vmem>>) attributes {dimension_semantics = [#tpu.dimension_semantics<parallel>], iteration_bounds = array<i64: 1>, scalar_prefetch = 0 : i64, scratch_operands = 0 : i64, tpu.core_type = #tpu.core_type<tc>, window_params = [{transform_indices = @transform_0, window_bounds = array<i64: 16, 32>}, {pipeline_mode = #tpu.pipeline_mode<synchronous>, transform_indices = @transform_1, window_bounds = array<i64: 32, 128>}, {pipeline_mode = #tpu.pipeline_mode<synchronous>, transform_indices = @transform_2, window_bounds = array<i64: 1, 128>}, {pipeline_mode = #tpu.pipeline_mode<synchronous>, transform_indices = @transform_3, window_bounds = array<i64: 128, 128>}, {pipeline_mode = #tpu.pipeline_mode<synchronous>, transform_indices = @transform_4, window_bounds = array<i64: 1, 128>}, {transform_indices = @transform_5, window_bounds = array<i64: 2, 128>}, {transform_indices = @transform_6, window_bounds = array<i64: 2, 128>}]} {
    %c0 = arith.constant 0 : index
    %c0_0 = arith.constant 0 : index
    %0 = vector.load %arg1[%c0, %c0_0] : memref<16x32xf32, #tpu.memory_space<vmem>>, vector<16x32xf32>
    %c0_1 = arith.constant 0 : index
    %c0_2 = arith.constant 0 : index
    %1 = vector.load %arg2[%c0_1, %c0_2] : memref<32x128xf32, #tpu.memory_space<vmem>>, vector<32x128xf32>
    %cst = arith.constant dense<0.000000e+00> : vector<16x128xf32>
    %2 = tpu.matmul %0, %1, %cst {dimension_numbers = #tpu.dot_dimension_numbers<[1], [0], [0], [1], [0, 0, 1, 1], [], []>} : vector<16x32xf32>, vector<32x128xf32>, vector<16x128xf32> -> vector<16x128xf32>
    %c15_i32 = arith.constant 15 : i32
    %3 = tpu.dynamic_rotate %2 by %c15_i32 dim 0 : vector<16x128xf32>, i32 -> vector<16x128xf32>
    %c14_i32 = arith.constant 14 : i32
    %4 = tpu.dynamic_rotate %2 by %c14_i32 dim 0 : vector<16x128xf32>, i32 -> vector<16x128xf32>
    %c13_i32 = arith.constant 13 : i32
    %5 = tpu.dynamic_rotate %2 by %c13_i32 dim 0 : vector<16x128xf32>, i32 -> vector<16x128xf32>
    %6 = tpu.iota {dimensions = array<i32: 1>} : vector<2x8x8xi32>
    %cst_3 = arith.constant 0.000000e+00 : f32
    %7 = vector.broadcast %cst_3 : f32 to vector<2x128xf32>
    %c0_4 = arith.constant 0 : index
    %c0_5 = arith.constant 0 : index
    %8 = vector.load %arg7[%c0_4, %c0_5] : memref<2x128xf32, #tpu.memory_space<vmem>>, vector<2x128xf32>
    tpu.vector_store %arg7[%c0_4, %c0_5], %7 {strides = array<i32>} : memref<2x128xf32, #tpu.memory_space<vmem>>, vector<2x128xf32>,
    %9 = vector.extract_strided_slice %2 {offsets = [0, 0], sizes = [16, 8], strides = [1, 1]} : vector<16x128xf32> to vector<16x8xf32>
    %10 = vector.extract_strided_slice %3 {offsets = [0, 8], sizes = [16, 8], strides = [1, 1]} : vector<16x128xf32> to vector<16x8xf32>
    %11 = arith.addf %9, %10 : vector<16x8xf32>
    %12 = vector.shape_cast %11 : vector<16x8xf32> to vector<2x8x8xf32>
    %c7_i32 = arith.constant 7 : i32
    %13 = vector.broadcast %c7_i32 : i32 to vector<2x8x8xi32>
    %14 = arith.cmpi slt, %6, %13 : vector<2x8x8xi32>
    %cst_6 = arith.constant -1.000000e+30 : f32
    %15 = vector.broadcast %cst_6 : f32 to vector<2x8x8xf32>
    %16 = arith.select %14, %12, %15 : vector<2x8x8xi1>, vector<2x8x8xf32>
    %cst_7 = arith.constant dense<0xFF800000> : vector<2x8xf32>
    %17 = vector.multi_reduction <maximumf>, %16, %cst_7 [1] : vector<2x8x8xf32> to vector<2x8xf32>
    %c0_8 = arith.constant 0 : index
    %c0_9 = arith.constant 0 : index
    %18 = vector.load %arg3[%c0_8, %c0_9] : memref<1x128xf32, #tpu.memory_space<vmem>>, vector<1x8xf32>
    %19 = vector.broadcast %18 : vector<1x8xf32> to vector<2x8xf32>
    %20 = arith.addf %17, %19 : vector<2x8xf32>
    %cst_10 = arith.constant 0.000000e+00 : f32
    %21 = vector.broadcast %cst_10 : f32 to vector<2x8xf32>
    %22 = arith.maximumf %20, %21 : vector<2x8xf32>
    %c0_11 = arith.constant 0 : index
    %c0_12 = arith.constant 0 : index
    %23 = vector.load %arg7[%c0_11, %c0_12] : memref<2x128xf32, #tpu.memory_space<vmem>>, vector<2x8xf32>
    tpu.vector_store %arg7[%c0_11, %c0_12], %22 {strides = array<i32>} : memref<2x128xf32, #tpu.memory_space<vmem>>, vector<2x8xf32>,
    %24 = vector.extract_strided_slice %2 {offsets = [0, 16], sizes = [16, 8], strides = [1, 1]} : vector<16x128xf32> to vector<16x8xf32>
    %25 = vector.extract_strided_slice %3 {offsets = [0, 24], sizes = [16, 8], strides = [1, 1]} : vector<16x128xf32> to vector<16x8xf32>
    %26 = arith.addf %24, %25 : vector<16x8xf32>
    %27 = vector.extract_strided_slice %4 {offsets = [0, 32], sizes = [16, 8], strides = [1, 1]} : vector<16x128xf32> to vector<16x8xf32>
    %28 = arith.addf %26, %27 : vector<16x8xf32>
    %29 = vector.shape_cast %28 : vector<16x8xf32> to vector<2x8x8xf32>
    %c6_i32 = arith.constant 6 : i32
    %30 = vector.broadcast %c6_i32 : i32 to vector<2x8x8xi32>
    %31 = arith.cmpi slt, %6, %30 : vector<2x8x8xi32>
    %cst_13 = arith.constant -1.000000e+30 : f32
    %32 = vector.broadcast %cst_13 : f32 to vector<2x8x8xf32>
    %33 = arith.select %31, %29, %32 : vector<2x8x8xi1>, vector<2x8x8xf32>
    %cst_14 = arith.constant dense<0xFF800000> : vector<2x8xf32>
    %34 = vector.multi_reduction <maximumf>, %33, %cst_14 [1] : vector<2x8x8xf32> to vector<2x8xf32>
    %c0_15 = arith.constant 0 : index
    %c8 = arith.constant 8 : index
    %35 = vector.load %arg3[%c0_15, %c8] : memref<1x128xf32, #tpu.memory_space<vmem>>, vector<1x8xf32>
    %36 = vector.broadcast %35 : vector<1x8xf32> to vector<2x8xf32>
    %37 = arith.addf %34, %36 : vector<2x8xf32>
    %cst_16 = arith.constant 0.000000e+00 : f32
    %38 = vector.broadcast %cst_16 : f32 to vector<2x8xf32>
    %39 = arith.maximumf %37, %38 : vector<2x8xf32>
    %c0_17 = arith.constant 0 : index
    %c8_18 = arith.constant 8 : index
    %40 = vector.load %arg7[%c0_17, %c8_18] : memref<2x128xf32, #tpu.memory_space<vmem>>, vector<2x8xf32>
    tpu.vector_store %arg7[%c0_17, %c8_18], %39 {strides = array<i32>} : memref<2x128xf32, #tpu.memory_space<vmem>>, vector<2x8xf32>,
    %41 = vector.extract_strided_slice %2 {offsets = [0, 40], sizes = [16, 8], strides = [1, 1]} : vector<16x128xf32> to vector<16x8xf32>
    %42 = vector.extract_strided_slice %3 {offsets = [0, 48], sizes = [16, 8], strides = [1, 1]} : vector<16x128xf32> to vector<16x8xf32>
    %43 = arith.addf %41, %42 : vector<16x8xf32>
    %44 = vector.extract_strided_slice %4 {offsets = [0, 56], sizes = [16, 8], strides = [1, 1]} : vector<16x128xf32> to vector<16x8xf32>
    %45 = arith.addf %43, %44 : vector<16x8xf32>
    %46 = vector.extract_strided_slice %5 {offsets = [0, 64], sizes = [16, 8], strides = [1, 1]} : vector<16x128xf32> to vector<16x8xf32>
    %47 = arith.addf %45, %46 : vector<16x8xf32>
    %48 = vector.shape_cast %47 : vector<16x8xf32> to vector<2x8x8xf32>
    %c5_i32 = arith.constant 5 : i32
    %49 = vector.broadcast %c5_i32 : i32 to vector<2x8x8xi32>
    %50 = arith.cmpi slt, %6, %49 : vector<2x8x8xi32>
    %cst_19 = arith.constant -1.000000e+30 : f32
    %51 = vector.broadcast %cst_19 : f32 to vector<2x8x8xf32>
    %52 = arith.select %50, %48, %51 : vector<2x8x8xi1>, vector<2x8x8xf32>
    %cst_20 = arith.constant dense<0xFF800000> : vector<2x8xf32>
    %53 = vector.multi_reduction <maximumf>, %52, %cst_20 [1] : vector<2x8x8xf32> to vector<2x8xf32>
    %c0_21 = arith.constant 0 : index
    %c16 = arith.constant 16 : index
    %54 = vector.load %arg3[%c0_21, %c16] : memref<1x128xf32, #tpu.memory_space<vmem>>, vector<1x8xf32>
    %55 = vector.broadcast %54 : vector<1x8xf32> to vector<2x8xf32>
    %56 = arith.addf %53, %55 : vector<2x8xf32>
    %cst_22 = arith.constant 0.000000e+00 : f32
    %57 = vector.broadcast %cst_22 : f32 to vector<2x8xf32>
    %58 = arith.maximumf %56, %57 : vector<2x8xf32>
    %c0_23 = arith.constant 0 : index
    %c16_24 = arith.constant 16 : index
    %59 = vector.load %arg7[%c0_23, %c16_24] : memref<2x128xf32, #tpu.memory_space<vmem>>, vector<2x8xf32>
    tpu.vector_store %arg7[%c0_23, %c16_24], %58 {strides = array<i32>} : memref<2x128xf32, #tpu.memory_space<vmem>>, vector<2x8xf32>,
    %c0_25 = arith.constant 0 : index
    %c0_26 = arith.constant 0 : index
    %60 = vector.load %arg7[%c0_25, %c0_26] : memref<2x128xf32, #tpu.memory_space<vmem>>, vector<2x128xf32>
    %c0_27 = arith.constant 0 : index
    %c0_28 = arith.constant 0 : index
    %61 = vector.load %arg4[%c0_27, %c0_28] : memref<128x128xf32, #tpu.memory_space<vmem>>, vector<128x128xf32>
    %cst_29 = arith.constant dense<0.000000e+00> : vector<2x128xf32>
    %62 = tpu.matmul %60, %61, %cst_29 {dimension_numbers = #tpu.dot_dimension_numbers<[1], [0], [0], [1], [0, 0, 1, 1], [], []>} : vector<2x128xf32>, vector<128x128xf32>, vector<2x128xf32> -> vector<2x128xf32>
    %c0_30 = arith.constant 0 : index
    %c0_31 = arith.constant 0 : index
    %63 = vector.load %arg5[%c0_30, %c0_31] : memref<1x128xf32, #tpu.memory_space<vmem>>, vector<1x128xf32>
    %64 = vector.broadcast %63 : vector<1x128xf32> to vector<2x128xf32>
    %65 = arith.addf %62, %64 : vector<2x128xf32>
    %cst_32 = arith.constant dense<0xFF800000> : vector<2xf32>
    %66 = vector.multi_reduction <maximumf>, %65, %cst_32 [1] : vector<2x128xf32> to vector<2xf32>
    %67 = vector.shape_cast %66 : vector<2xf32> to vector<2x1xf32>
    %68 = vector.broadcast %67 : vector<2x1xf32> to vector<2x128xf32>
    %69 = arith.subf %65, %68 : vector<2x128xf32>
    %70 = math.exp %69 : vector<2x128xf32>
    %cst_33 = arith.constant dense<0.000000e+00> : vector<2xf32>
    %71 = vector.multi_reduction <add>, %70, %cst_33 [1] : vector<2x128xf32> to vector<2xf32>
    %72 = vector.shape_cast %71 : vector<2xf32> to vector<2x1xf32>
    %73 = tpu.reciprocal %72 {approx = true} : vector<2x1xf32> -> vector<2x1xf32>
    %74 = vector.broadcast %73 : vector<2x1xf32> to vector<2x128xf32>
    %75 = arith.mulf %70, %74 : vector<2x128xf32>
    %c0_34 = arith.constant 0 : index
    %c0_35 = arith.constant 0 : index
    %76 = vector.load %arg6[%c0_34, %c0_35] : memref<2x128xf32, #tpu.memory_space<vmem>>, vector<2x128xf32>
    tpu.vector_store %arg6[%c0_34, %c0_35], %75 {strides = array<i32>} : memref<2x128xf32, #tpu.memory_space<vmem>>, vector<2x128xf32>,
    return
  }
  func.func @transform_0(%arg0: i32) -> (i32, i32) {
    %c0_i32 = arith.constant 0 : i32
    %c0_i32_0 = arith.constant 0 : i32
    return %arg0, %c0_i32 : i32, i32
  }
  func.func @transform_1(%arg0: i32) -> (i32, i32) {
    %c0_i32 = arith.constant 0 : i32
    %c0_i32_0 = arith.constant 0 : i32
    %c0_i32_1 = arith.constant 0 : i32
    return %c0_i32, %c0_i32_0 : i32, i32
  }
  func.func @transform_2(%arg0: i32) -> (i32, i32) {
    %c0_i32 = arith.constant 0 : i32
    %c0_i32_0 = arith.constant 0 : i32
    %c0_i32_1 = arith.constant 0 : i32
    return %c0_i32, %c0_i32_0 : i32, i32
  }
  func.func @transform_3(%arg0: i32) -> (i32, i32) {
    %c0_i32 = arith.constant 0 : i32
    %c0_i32_0 = arith.constant 0 : i32
    %c0_i32_1 = arith.constant 0 : i32
    return %c0_i32, %c0_i32_0 : i32, i32
  }
  func.func @transform_4(%arg0: i32) -> (i32, i32) {
    %c0_i32 = arith.constant 0 : i32
    %c0_i32_0 = arith.constant 0 : i32
    %c0_i32_1 = arith.constant 0 : i32
    return %c0_i32, %c0_i32_0 : i32, i32
  }
  func.func @transform_5(%arg0: i32) -> (i32, i32) {
    %c0_i32 = arith.constant 0 : i32
    %c0_i32_0 = arith.constant 0 : i32
    return %arg0, %c0_i32 : i32, i32
  }
  func.func @transform_6(%arg0: i32) -> (i32, i32) {
    %c0_i32 = arith.constant 0 : i32
    %c0_i32_0 = arith.constant 0 : i32
    return %arg0, %c0_i32 : i32, i32
  }
}

</mosaic_0001>

<llo_original>
// kernel: tpu_custom_call.1
$region0: #{tpu_custom_call.1}
  #allocation0 [shape = 'u32[]', space=smem, size = 0x4, offset = 0x4, fixed_abs, tag = 'smem constant byte address 0x4 - core index']
  #allocation1 [shape = 'u32[144,128]{1,0:T(1,128)}', space=vmem, size = 0x12000, scoped, tag = 'internal scratch']
  %s0 = inlined_call_operand.hbm [shape: f32[16,32], index: 0, kind: input, shape index: {}]
  %s1 = inlined_call_operand.hbm [shape: f32[32,128], index: 1, kind: input, shape index: {}]
  %s2 = inlined_call_operand.vmem [shape: f32[1,128], index: 2, kind: input, shape index: {}]
  %s3 = inlined_call_operand.hbm [shape: f32[128,128], index: 3, kind: input, shape index: {}]
  %s4 = inlined_call_operand.vmem [shape: f32[1,128], index: 4, kind: input, shape index: {}]
  %s5 = inlined_call_operand.hbm [shape: f32[2,128], index: 5, kind: output, shape index: {0}]
  %s6 = inlined_call_operand.hbm [shape: f32[2,128], index: 6, kind: output, shape index: {1}]
  %7 = xla_tuple %s5, %s6
  %s8 = sld [smem:[#allocation0]]
  $region50: #{tpu_custom_call.1} parent=0
    _
  %s10 = ssub.s32 1, %s8
  %s11 = scalar_select 0, %s10, %s8
  $region1: #{tpu_custom_call.1} parent=0
    #allocation2 [shape = 'u8[8192]{0}', space=vmem, size = 0x2000, scoped, tag = 'input window, operand 0, single buffered']
    #allocation3 [shape = 's32[1]{0}', space=sflag, size = 0x4, scoped, tag = 'scoped memory for tpu_custom_call.1']
    #allocation4 [shape = 's32[1]{0}', space=sflag, size = 0x4, scoped, tag = 'scoped memory for tpu_custom_call.1']
    #allocation5 [shape = 'u8[16384]{0}', space=vmem, size = 0x4000, scoped, tag = 'input window, operand 1, single buffered']
    #allocation6 [shape = 's32[1]{0}', space=sflag, size = 0x4, scoped, tag = 'scoped memory for tpu_custom_call.1']
    #allocation7 [shape = 'u8[65536]{0}', space=vmem, size = 0x10000, scoped, tag = 'input window, operand 3, single buffered']
    #allocation8 [shape = 'u8[1024]{0}', space=vmem, size = 0x400, scoped, tag = 'output window, operand 0, single buffered']
    #allocation9 [shape = 'u8[1024]{0}', space=vmem, size = 0x400, scoped, tag = 'output window, operand 1, single buffered']
    #allocation10 [shape = 's32[1]{0}', space=sflag, size = 0x4, scoped, tag = 'scoped memory for tpu_custom_call.1']
    %12 = vsyncpa [#allocation3], 0
    %13 = vsyncpa [#allocation6], 0
    %14 = vsyncpa [#allocation4], 0
    %15 = vsyncpa [#allocation10], 0
    // Predicated region
    $region2: #{tpu_custom_call.1} parent=1 // pred_check
      _
    $region3: #{tpu_custom_call.1} parent=1 // pred_check_branch
      %17 = sbr.rel (0) target = $region5
    $region4: #{tpu_custom_call.1} parent=1 // pred_region
      %s19 = ssub.s32 256, 256
      %20 = vsyncadd [#allocation3], %s19
      %s21 = sshll.u32 [#allocation2], 4
      %s22 = int_to_ptr.vmem [resolvable:$true] %s21
      %27 = dma.hbm_to_vmem [thread:$0]  %s0, 256, %s22, [#allocation3], 128, 128, 8
    $region5: #{tpu_custom_call.1} parent=1 // pred_fallthru
      _
    // Predicated region
    $region6: #{tpu_custom_call.1} parent=1 // pred_check
      _
    $region7: #{tpu_custom_call.1} parent=1 // pred_check_branch
      %29 = sbr.rel (0) target = $region9
    $region8: #{tpu_custom_call.1} parent=1 // pred_region
      %s31 = ssub.s32 512, 512
      %32 = vsyncadd [#allocation6], %s31
      %s33 = sshll.u32 [#allocation5], 4
      %s34 = int_to_ptr.vmem [resolvable:$true] %s33
      %39 = dma.hbm_to_vmem [thread:$0]  %s1, 512, %s34, [#allocation6], 128, 128, 8
    $region9: #{tpu_custom_call.1} parent=1 // pred_fallthru
      _
    // Predicated region
    $region10: #{tpu_custom_call.1} parent=1 // pred_check
      _
    $region11: #{tpu_custom_call.1} parent=1 // pred_check_branch
      %41 = sbr.rel (0) target = $region13
    $region12: #{tpu_custom_call.1} parent=1 // pred_region
      _
    $region13: #{tpu_custom_call.1} parent=1 // pred_fallthru
      _
    // Predicated region
    $region14: #{tpu_custom_call.1} parent=1 // pred_check
      _
    $region15: #{tpu_custom_call.1} parent=1 // pred_check_branch
      %43 = sbr.rel (0) target = $region17
    $region16: #{tpu_custom_call.1} parent=1 // pred_region
      %s45 = ssub.s32 2048, 2048
      %46 = vsyncadd [#allocation6], %s45
      %s47 = sshll.u32 [#allocation7], 4
      %s48 = int_to_ptr.vmem [resolvable:$true] %s47
      %53 = dma.hbm_to_vmem [thread:$0]  %s3, 2048, %s48, [#allocation6], 128, 128, 8
    $region17: #{tpu_custom_call.1} parent=1 // pred_fallthru
      _
    // Predicated region
    $region18: #{tpu_custom_call.1} parent=1 // pred_check
      _
    $region19: #{tpu_custom_call.1} parent=1 // pred_check_branch
      %55 = sbr.rel (0) target = $region21
    $region20: #{tpu_custom_call.1} parent=1 // pred_region
      _
    $region21: #{tpu_custom_call.1} parent=1 // pred_fallthru
      _
    // Predicated region
    $region22: #{tpu_custom_call.1} parent=1 // pred_check
      _
    $region23: #{tpu_custom_call.1} parent=1 // pred_check_branch
      %57 = sbr.rel (0) target = $region25
    $region24: #{tpu_custom_call.1} parent=1 // pred_region
      %58 = dma.done [#allocation3], 256
    $region25: #{tpu_custom_call.1} parent=1 // pred_fallthru
      _
    // Predicated region
    $region26: #{tpu_custom_call.1} parent=1 // pred_check
      _
    $region27: #{tpu_custom_call.1} parent=1 // pred_check_branch
      %60 = sbr.rel (0) target = $region29
    $region28: #{tpu_custom_call.1} parent=1 // pred_region
      %61 = dma.done [#allocation6], 512
    $region29: #{tpu_custom_call.1} parent=1 // pred_fallthru
      _
    // Predicated region
    $region30: #{tpu_custom_call.1} parent=1 // pred_check
      _
    $region31: #{tpu_custom_call.1} parent=1 // pred_check_branch
      %63 = sbr.rel (0) target = $region33
    $region32: #{tpu_custom_call.1} parent=1 // pred_region
      %64 = dma.done [#allocation6], 2048
    $region33: #{tpu_custom_call.1} parent=1 // pred_fallthru
      _
    %v65 = vld [vmem:[#allocation2] sm:$0xff]
    %v66 = vld [vmem:[#allocation2 + $0x8] sm:$0xff]
    %v67 = vld [vmem:[#allocation5] sm:$0xff]
    %v68 = vld [vmem:[#allocation5 + $0x8] sm:$0xff]
    %v69 = vld [vmem:[#allocation5 + $0x10] sm:$0xff]
    %v70 = vld [vmem:[#allocation5 + $0x18] sm:$0xff]
    %vm71 = vcmask 261120
    %v73 = vsel %vm71, %v65, 0
    %v76 = vsel %vm71, %v66, 0
    %78 = vmatprep.subr.mxu0 0.0
    %79 = vmatpush1.msra.mxu0 0.0
    %80 = vmatprep.subr.mxu0 0.0
    %81 = vmatpush1.msra.mxu0 0.0
    %82 = vmatprep.subr.mxu0 0.0
    %83 = vmatpush1.msra.mxu0 0.0
    %84 = vmatprep.subr.mxu0 0.0
    %85 = vmatpush1.msra.mxu0 0.0
    %86 = vmatprep.subr.mxu0 0.0
    %87 = vmatpush1.msra.mxu0 0.0
    %88 = vmatprep.subr.mxu0 0.0
    %89 = vmatpush1.msra.mxu0 0.0
    %90 = vmatprep.subr.mxu0 0.0
    %91 = vmatpush1.msra.mxu0 0.0
    %92 = vmatprep.subr.mxu0 0.0
    %93 = vmatpush1.msra.mxu0 0.0
    %94 = vmatprep.subr.mxu0 0.0
    %95 = vmatpush1.msra.mxu0 0.0
    %96 = vmatprep.subr.mxu0 0.0
    %97 = vmatpush1.msra.mxu0 0.0
    %98 = vmatprep.subr.mxu0 0.0
    %99 = vmatpush1.msra.mxu0 0.0
    %100 = vmatprep.subr.mxu0 0.0
    %101 = vmatpush1.msra.mxu0 0.0
    %102 = vmatprep.subr.mxu0 0.0
    %103 = vmatpush1.msra.mxu0 %v70
    %104 = vmatprep.subr.mxu0 0.0
    %105 = vmatpush1.msra.mxu0 %v69
    %106 = vmatprep.subr.mxu0 0.0
    %107 = vmatpush1.msra.mxu0 %v68
    %108 = vmatprep.subr.mxu0 0.0
    %109 = vmatpush1.msra.mxu0 %v67
    %110 = vmatprep.subr.mxu0 0.0
    %111 = vmatpush2.msra.mxu0 0.0
    %112 = vmatprep.subr.mxu0 0.0
    %113 = vmatpush2.msra.mxu0 0.0
    %114 = vmatprep.subr.mxu0 0.0
    %115 = vmatpush2.msra.mxu0 0.0
    %116 = vmatprep.subr.mxu0 0.0
    %117 = vmatpush2.msra.mxu0 0.0
    %118 = vmatprep.subr.mxu0 0.0
    %119 = vmatpush2.msra.mxu0 0.0
    %120 = vmatprep.subr.mxu0 0.0
    %121 = vmatpush2.msra.mxu0 0.0
    %122 = vmatprep.subr.mxu0 0.0
    %123 = vmatpush2.msra.mxu0 0.0
    %124 = vmatprep.subr.mxu0 0.0
    %125 = vmatpush2.msra.mxu0 0.0
    %126 = vmatprep.subr.mxu0 0.0
    %127 = vmatpush2.msra.mxu0 0.0
    %128 = vmatprep.subr.mxu0 0.0
    %129 = vmatpush2.msra.mxu0 0.0
    %130 = vmatprep.subr.mxu0 0.0
    %131 = vmatpush2.msra.mxu0 0.0
    %132 = vmatprep.subr.mxu0 0.0
    %133 = vmatpush2.msra.mxu0 0.0
    %134 = vmatprep.subr.mxu0 0.0
    %135 = vmatpush2.msra.mxu0 0.0
    %136 = vmatprep.subr.mxu0 0.0
    %137 = vmatpush2.msra.mxu0 0.0
    %138 = vmatprep.subr.mxu0 0.0
    %139 = vmatpush2.msra.mxu0 0.0
    %140 = vmatprep.subr.mxu0 0.0
    %141 = vmatpush2.msra.mxu0 0.0
    %142 = vmatprep.mubr.f32.mxu0 0.0
    %143 = vmatmul.mubr.f32.gmra.mxu0 %v73
    %v144 = vpop.f32.mrf.mxu0
    %v145 = vadd.f32 0.0, %v144
    %v146 = vpop.f32.mrf.mxu0
    %147 = vmatprep.mubr.f32.mxu0 0.0
    %148 = vmatmul.mubr.f32.gmra.mxu0 %v76
    %v149 = vpop.f32.mrf.mxu0
    %v150 = vadd.f32 0.0, %v149
    %v151 = vpop.f32.mrf.mxu0
    %152 = vdwg.mxu0
    %v153 = vrot.slane %v145, 1
    %v154 = vrot.slane %v150, 1
    %v155 = vlaneseq
    %v156 = vshrl.u32 %v155, 7
    %vm157 = vcmp.lt.s32.totalorder %v156, 7
    %v158 = vsel %vm157, %v153, %v154
    %v159 = vsel %vm157, %v154, %v153
    %v160 = vrot.slane %v145, 2
    %v161 = vrot.slane %v150, 2
    %vm162 = vcmp.lt.s32.totalorder %v156, 6
    %v163 = vsel %vm162, %v160, %v161
    %v164 = vsel %vm162, %v161, %v160
    %v165 = vrot.slane %v145, 3
    %v166 = vrot.slane %v150, 3
    %vm167 = vcmp.lt.s32.totalorder %v156, 5
    %v168 = vsel %vm167, %v165, %v166
    %v169 = vsel %vm167, %v166, %v165
    %170 = vst [vmem:[#allocation9] sm:$0x3] 0.0
    %173 = vrot.lane.b32.xlu0 %v158, 120
    %v174 = vpop.permute.xlu0 %173
    %175 = vrot.lane.b32.xlu0 %v159, 120
    %v176 = vpop.permute.xlu0 %175
    %v179 = vadd.f32 %v145, %v174
    %v180 = vadd.f32 %v150, %v176
    %v181 = vsel %vm157, %v179, -1e+30
    %v182 = vsel %vm157, %v180, -1e+30
    %vm183 = vcmask 64512
    %v184 = vsel %vm183, %v181, -inf
    %v185 = vrot.slane %v184, 4
    %v186 = vmax.f32 %v184, %v185
    %v187 = vrot.slane %v186, 2
    %v188 = vmax.f32 %v186, %v187
    %v189 = vrot.slane %v188, 1
    %v190 = vmax.f32 %v188, %v189
    %v191 = vsel %vm183, %v182, -inf
    %v192 = vrot.slane %v191, 4
    %v193 = vmax.f32 %v191, %v192
    %v194 = vrot.slane %v193, 2
    %v195 = vmax.f32 %v193, %v194
    %v196 = vrot.slane %v195, 1
    %v197 = vmax.f32 %v195, %v196
    %v198 = vld [vmem:[%s2] sm:$0x1]
    %v200 = vlaneseq
    %v201 = vshrl.u32 %v200, 7
    %v202 = vsub.s32 0, %v201
    %v203 = vrot.slane %v198, %v202
    %v205 = vadd.f32 %v190, %v203
    %v206 = vadd.f32 %v197, %v203
    %v207 = vmax.f32 %v205, 0.0
    %v208 = vmax.f32 %v206, 0.0
    %v211 = vrot.slane %v208, 7
    %vm212 = vcmask 1041409
    %v213 = vsel %vm212, %v211, %v207
    %vm215 = vcmask 58368
    %216 = vst.msk [vmem:[#allocation9] sm:$0x3] %vm215, %v213
    %219 = vrot.lane.b32.xlu0 %v163, 112
    %v220 = vpop.permute.xlu0 %219
    %221 = vrot.lane.b32.xlu0 %v164, 112
    %v222 = vpop.permute.xlu0 %221
    %v225 = vadd.f32 %v179, %v220
    %v226 = vadd.f32 %v180, %v222
    %v227 = vsel %vm162, %v225, -1e+30
    %v228 = vsel %vm162, %v226, -1e+30
    %vm229 = vcmask 195712
    %v230 = vsel %vm229, %v227, -inf
    %v231 = vrot.slane %v230, 4
    %v232 = vmax.f32 %v230, %v231
    %v233 = vrot.slane %v232, 2
    %v234 = vmax.f32 %v232, %v233
    %v235 = vrot.slane %v234, 1
    %v236 = vmax.f32 %v234, %v235
    %v237 = vsel %vm229, %v228, -inf
    %v238 = vrot.slane %v237, 4
    %v239 = vmax.f32 %v237, %v238
    %v240 = vrot.slane %v239, 2
    %v241 = vmax.f32 %v239, %v240
    %v242 = vrot.slane %v241, 1
    %v243 = vmax.f32 %v241, %v242
    %v244 = vld [vmem:[%s2] sm:$0x1]
    %v246 = vlaneseq
    %v247 = vshrl.u32 %v246, 7
    %v248 = vsub.s32 0, %v247
    %v249 = vrot.slane %v244, %v248
    %250 = vrot.lane.b32.xlu0 %v249, 8
    %v251 = vpop.permute.xlu0 %250
    %v253 = vadd.f32 %v236, %v251
    %v254 = vadd.f32 %v243, %v251
    %v255 = vmax.f32 %v253, 0.0
    %v256 = vmax.f32 %v254, 0.0
    %v259 = vrot.slane %v256, 7
    %v260 = vsel %vm212, %v259, %v255
    %261 = vrot.lane.b32.xlu0 %v260, 120
    %v262 = vpop.permute.xlu0 %261
    %vm264 = vcmask 123968
    %265 = vst.msk [vmem:[#allocation9] sm:$0x3] %vm264, %v262
    %268 = vrot.lane.b32.xlu0 %v168, 104
    %v269 = vpop.permute.xlu0 %268
    %270 = vrot.lane.b32.xlu0 %v169, 104
    %v271 = vpop.permute.xlu0 %270
    %v274 = vadd.f32 %v225, %v269
    %v275 = vadd.f32 %v226, %v271
    %v276 = vsel %vm167, %v274, -1e+30
    %v277 = vsel %vm167, %v275, -1e+30
    %vm278 = vcmask 392512
    %v279 = vsel %vm278, %v276, -inf
    %v280 = vrot.slane %v279, 4
    %v281 = vmax.f32 %v279, %v280
    %v282 = vrot.slane %v281, 2
    %v283 = vmax.f32 %v281, %v282
    %v284 = vrot.slane %v283, 1
    %v285 = vmax.f32 %v283, %v284
    %v286 = vsel %vm278, %v277, -inf
    %v287 = vrot.slane %v286, 4
    %v288 = vmax.f32 %v286, %v287
    %v289 = vrot.slane %v288, 2
    %v290 = vmax.f32 %v288, %v289
    %v291 = vrot.slane %v290, 1
    %v292 = vmax.f32 %v290, %v291
    %v293 = vld [vmem:[%s2] sm:$0x1]
    %v295 = vlaneseq
    %v296 = vshrl.u32 %v295, 7
    %v297 = vsub.s32 0, %v296
    %v298 = vrot.slane %v293, %v297
    %299 = vrot.lane.b32.xlu0 %v298, 24
    %v300 = vpop.permute.xlu0 %299
    %v302 = vadd.f32 %v285, %v300
    %v303 = vadd.f32 %v292, %v300
    %v304 = vmax.f32 %v302, 0.0
    %v305 = vmax.f32 %v303, 0.0
    %v308 = vrot.slane %v305, 7
    %v309 = vsel %vm212, %v308, %v304
    %310 = vrot.lane.b32.xlu0 %v309, 104
    %v311 = vpop.permute.xlu0 %310
    %vm313 = vcmask 189568
    %314 = vst.msk [vmem:[#allocation9] sm:$0x3] %vm313, %v311
    %v315 = vld [vmem:[#allocation9] sm:$0x3]
    %v316 = vld [vmem:[#allocation7] sm:$0xff]
    %v317 = vld [vmem:[#allocation7 + $0x8] sm:$0xff]
    %v318 = vld [vmem:[#allocation7 + $0x10] sm:$0xff]
    %v319 = vld [vmem:[#allocation7 + $0x18] sm:$0xff]
    %v320 = vld [vmem:[#allocation7 + $0x20] sm:$0xff]
    %v321 = vld [vmem:[#allocation7 + $0x28] sm:$0xff]
    %v322 = vld [vmem:[#allocation7 + $0x30] sm:$0xff]
    %v323 = vld [vmem:[#allocation7 + $0x38] sm:$0xff]
    %v324 = vld [vmem:[#allocation7 + $0x40] sm:$0xff]
    %v325 = vld [vmem:[#allocation7 + $0x48] sm:$0xff]
    %v326 = vld [vmem:[#allocation7 + $0x50] sm:$0xff]
    %v327 = vld [vmem:[#allocation7 + $0x58] sm:$0xff]
    %v328 = vld [vmem:[#allocation7 + $0x60] sm:$0xff]
    %v329 = vld [vmem:[#allocation7 + $0x68] sm:$0xff]
    %v330 = vld [vmem:[#allocation7 + $0x70] sm:$0xff]
    %v331 = vld [vmem:[#allocation7 + $0x78] sm:$0xff]
    %v332 = vld [vmem:[%s4] sm:$0x1]
    %v334 = vlaneseq
    %v335 = vshrl.u32 %v334, 7
    %v336 = vsub.s32 0, %v335
    %v337 = vrot.slane %v332, %v336
    %339 = vmatprep.subr.mxu0 0.0
    %340 = vmatpush1.msra.mxu0 %v331
    %341 = vmatprep.subr.mxu0 0.0
    %342 = vmatpush1.msra.mxu0 %v330
    %343 = vmatprep.subr.mxu0 0.0
    %344 = vmatpush1.msra.mxu0 %v329
    %345 = vmatprep.subr.mxu0 0.0
    %346 = vmatpush1.msra.mxu0 %v328
    %347 = vmatprep.subr.mxu0 0.0
    %348 = vmatpush1.msra.mxu0 %v327
    %349 = vmatprep.subr.mxu0 0.0
    %350 = vmatpush1.msra.mxu0 %v326
    %351 = vmatprep.subr.mxu0 0.0
    %352 = vmatpush1.msra.mxu0 %v325
    %353 = vmatprep.subr.mxu0 0.0
    %354 = vmatpush1.msra.mxu0 %v324
    %355 = vmatprep.subr.mxu0 0.0
    %356 = vmatpush1.msra.mxu0 %v323
    %357 = vmatprep.subr.mxu0 0.0
    %358 = vmatpush1.msra.mxu0 %v322
    %359 = vmatprep.subr.mxu0 0.0
    %360 = vmatpush1.msra.mxu0 %v321
    %361 = vmatprep.subr.mxu0 0.0
    %362 = vmatpush1.msra.mxu0 %v320
    %363 = vmatprep.subr.mxu0 0.0
    %364 = vmatpush1.msra.mxu0 %v319
    %365 = vmatprep.subr.mxu0 0.0
    %366 = vmatpush1.msra.mxu0 %v318
    %367 = vmatprep.subr.mxu0 0.0
    %368 = vmatpush1.msra.mxu0 %v317
    %369 = vmatprep.subr.mxu0 0.0
    %370 = vmatpush1.msra.mxu0 %v316
    %371 = vmatprep.subr.mxu0 0.0
    %372 = vmatpush2.msra.mxu0 0.0
    %373 = vmatprep.subr.mxu0 0.0
    %374 = vmatpush2.msra.mxu0 0.0
    %375 = vmatprep.subr.mxu0 0.0
    %376 = vmatpush2.msra.mxu0 0.0
    %377 = vmatprep.subr.mxu0 0.0
    %378 = vmatpush2.msra.mxu0 0.0
    %379 = vmatprep.subr.mxu0 0.0
    %380 = vmatpush2.msra.mxu0 0.0
    %381 = vmatprep.subr.mxu0 0.0
    %382 = vmatpush2.msra.mxu0 0.0
    %383 = vmatprep.subr.mxu0 0.0
    %384 = vmatpush2.msra.mxu0 0.0
    %385 = vmatprep.subr.mxu0 0.0
    %386 = vmatpush2.msra.mxu0 0.0
    %387 = vmatprep.subr.mxu0 0.0
    %388 = vmatpush2.msra.mxu0 0.0
    %389 = vmatprep.subr.mxu0 0.0
    %390 = vmatpush2.msra.mxu0 0.0
    %391 = vmatprep.subr.mxu0 0.0
    %392 = vmatpush2.msra.mxu0 0.0
    %393 = vmatprep.subr.mxu0 0.0
    %394 = vmatpush2.msra.mxu0 0.0
    %395 = vmatprep.subr.mxu0 0.0
    %396 = vmatpush2.msra.mxu0 0.0
    %397 = vmatprep.subr.mxu0 0.0
    %398 = vmatpush2.msra.mxu0 0.0
    %399 = vmatprep.subr.mxu0 0.0
    %400 = vmatpush2.msra.mxu0 0.0
    %401 = vmatprep.subr.mxu0 0.0
    %402 = vmatpush2.msra.mxu0 0.0
    %403 = vmatprep.mubr.f32.mxu0 0.0
    %404 = vmatmul.mubr.f32.gmra.mxu0 %v315
    %v405 = vpop.f32.mrf.mxu0
    %v406 = vadd.f32 %v337, %v405
    %v407 = vpop.f32.mrf.mxu0
    %408 = vdwg.mxu0
    %vm409 = vcmask 1041408
    %v410 = vsel %vm409, %v406, -inf
    %411 = vmax.xlane.f32.xlu0 %v410
    %v412 = vpop.xlane.xlu0 %411
    %v413 = vsub.f32 %v406, %v412
    %v414 = vmul.f32 %v413, 1.442695
    %v415 = vpow.pop %v414
    %v416 = vsel %vm409, %v415, 0.0
    %417 = vadd.xlane.f32.xlu0 %v416
    %v418 = vpop.xlane.xlu0 %417
    %v419 = vrcp.pop %v418
    %v420 = vmul.f32 %v415, %v419
    %421 = vst [vmem:[#allocation8] sm:$0x3] %v420
    // Predicated region
    $region34: #{tpu_custom_call.1} parent=1 // pred_check
      _
    $region35: #{tpu_custom_call.1} parent=1 // pred_check_branch
      %423 = sbr.rel (0) target = $region37
    $region36: #{tpu_custom_call.1} parent=1 // pred_region
      %s425 = ssub.s32 32, 32
      %426 = vsyncadd [#allocation4], %s425
      %s428 = sshll.u32 [#allocation8], 4
      %s429 = int_to_ptr.vmem [resolvable:$true] %s428
      %431 = dma.vmem_to_hbm [thread:$0]  %s429, 32, %s5, [#allocation4]
    $region37: #{tpu_custom_call.1} parent=1 // pred_fallthru
      _
    // Predicated region
    $region38: #{tpu_custom_call.1} parent=1 // pred_check
      _
    $region39: #{tpu_custom_call.1} parent=1 // pred_check_branch
      %433 = sbr.rel (0) target = $region41
    $region40: #{tpu_custom_call.1} parent=1 // pred_region
      %s435 = ssub.s32 32, 32
      %436 = vsyncadd [#allocation10], %s435
      %s438 = sshll.u32 [#allocation9], 4
      %s439 = int_to_ptr.vmem [resolvable:$true] %s438
      %441 = dma.vmem_to_hbm [thread:$0]  %s439, 32, %s6, [#allocation10]
    $region41: #{tpu_custom_call.1} parent=1 // pred_fallthru
      _
    // Predicated region
    $region42: #{tpu_custom_call.1} parent=1 // pred_check
      _
    $region43: #{tpu_custom_call.1} parent=1 // pred_check_branch
      %443 = sbr.rel (0) target = $region45
    $region44: #{tpu_custom_call.1} parent=1 // pred_region
      %444 = dma.done [#allocation4], 32
    $region45: #{tpu_custom_call.1} parent=1 // pred_fallthru
      _
    // Predicated region
    $region46: #{tpu_custom_call.1} parent=1 // pred_check
      _
    $region47: #{tpu_custom_call.1} parent=1 // pred_check_branch
      %446 = sbr.rel (0) target = $region49
    $region48: #{tpu_custom_call.1} parent=1 // pred_region
      %447 = dma.done [#allocation10], 32
    $region49: #{tpu_custom_call.1} parent=1 // pred_fallthru
      _
    %448 = vsyncpa [#allocation3], 1
    %449 = vsyncpa [#allocation6], 1
    %450 = vsyncpa [#allocation4], 1
    %451 = vsyncpa [#allocation10], 1

</llo_original>
